<compile_context>
chip_gen: v6e
topology: v6e:2x2x1
jax: 0.10.0
libtpu: 0.0.40
codegen_flags: <defaults>
</compile_context>

<pallas_src>
import jax
import jax.numpy as jnp
from jax.experimental import pallas as pl
from jax.experimental.pallas import tpu as pltpu

DIM = 32          # hidden dim (toy; real Flux uses 3072)
SEQ = 8           # sequence length
GROUP = 64        # AWQ group size (module hard-codes 64)
N_CHUNKS = 6      # pre_only=False -> 6 * dim output columns
OUT = N_CHUNKS * DIM

_VMEM_LIMIT = 32 * 1024 * 1024        # explicit scoped-VMEM request (safe on v5e/v6e/v7x)
_TILE_BUDGET = 20 * 1024 * 1024       # per-tile working-set budget used by the tile pickers


# ----------------------------- tile-size helpers -----------------------------

def _pick_col_tile(n, d_rows, budget_bytes=_TILE_BUDGET):
    """Largest lane-aligned (multiple of 128) column tile dividing n that fits the VMEM
    budget; prefer even tile counts so v7x's two TensorCores split the weight stream."""
    # Dominant per-tile VMEM: int8 weight double-buffer (2 B/elem) + f32 widened temp (4 B/elem).
    max_tn = max(128, budget_bytes // (6 * d_rows))
    cands = [t for t in range(128, min(n, max_tn) + 1, 128) if n % t == 0]
    if not cands:
        return n                      # tiny problems: full extent (still legal block shape)
    even = [t for t in cands if (n // t) % 2 == 0]
    return max(even) if even else max(cands)


def _pick_row_tile(rows, d, budget_bytes=_TILE_BUDGET):
    """Row tile for the LN sweep: full extent when small, else a big 8-aligned tile that
    fits the budget (bf16 in/out double-buffered + f32 temporaries ~= 12 B/elem)."""
    if rows <= 8:
        return rows
    max_ts = max(8, budget_bytes // (12 * d))
    ts = min(rows, max_ts, 512)
    return max(8, (ts // 8) * 8)


# --------------------------- init-time weight prep ----------------------------

def prepare_adaln_weights(q_int8, wscales, wzeros, bias, dim, n_chunks, group_size=GROUP):
    """One-time layout prep.

    * Permute columns so chunk c occupies columns [c*dim, (c+1)*dim): the interleaved
      emb_linear.reshape(1, -1, 6).unbind(2) becomes a free contiguous reshape(6, dim).
    * Keep the quantized weight as int8 (narrow HBM stream).
    * Zero-pad the input-feature axis to a whole number of AWQ groups so the in-kernel
      per-group reshape is exact (padded rows contribute nothing).
    """
    n = dim * n_chunks
    perm = jnp.arange(n).reshape(dim, n_chunks).T.reshape(-1)
    q = q_int8[:, perm].astype(jnp.int8)
    s = wscales[:, perm]
    z = wzeros[:, perm]
    b = bias[perm].reshape(1, n)
    g = s.shape[0]
    d_pad = g * group_size
    if d_pad != q.shape[0]:
        q = jnp.pad(q, ((0, d_pad - q.shape[0]), (0, 0)))
    return q, s, z, b


# --------------------------------- kernels ------------------------------------

def awq_silu_gemv_kernel(h_ref, hsum_ref, q_ref, s_ref, z_ref, b_ref, out_ref):
    """One output-column tile of silu(emb) @ dequant(W) + bias.

    Exact-MAC VPU formulation: widen int8 weight, multiply by the resident activation
    column, per-group sublane reduction, then fold scale/zero post-reduction.
    """
    h = h_ref[...]                                            # (Dp, 1) f32, resident
    w = q_ref[...].astype(jnp.float32) * h                    # (Dp, TN) f32 (VPU widen+mul)
    g, tn = s_ref.shape
    gs = q_ref.shape[0] // g                                  # group size (static)
    part = jnp.sum(w.reshape(g, gs, tn), axis=1)              # (G, TN) per-group partial dot
    acc = jnp.sum(part * s_ref[...].astype(jnp.float32)
                  + hsum_ref[...] * z_ref[...].astype(jnp.float32),
                  axis=0, keepdims=True)                      # (1, TN)
    out_ref[...] = (acc + b_ref[...].astype(jnp.float32)).astype(out_ref.dtype)


def ln_mod_kernel(x_ref, scale_ref, shift_ref, o_ref):
    """LayerNorm(dim, eps=1e-6, no affine) + scale/shift modulation, one-pass variance."""
    x = x_ref[...].astype(jnp.float32)
    s1 = jnp.mean(x, axis=-1, keepdims=True)
    s2 = jnp.mean(x * x, axis=-1, keepdims=True)
    var = jnp.maximum(s2 - s1 * s1, 0.0)
    inv = jax.lax.rsqrt(var + 1e-6)
    y = (x - s1) * inv * scale_ref[...].astype(jnp.float32) + shift_ref[...].astype(jnp.float32)
    o_ref[...] = y.astype(o_ref.dtype)


# -------------------------------- wrappers ------------------------------------

def awq_silu_gemv(h_col, hsum, qweight, wscales, wzeros, bias2d):
    Dp = qweight.shape[0]
    N = bias2d.shape[-1]
    G = wscales.shape[0]
    TN = _pick_col_tile(N, Dp)
    grid = (N // TN,)
    return pl.pallas_call(
        awq_silu_gemv_kernel,
        out_shape=jax.ShapeDtypeStruct((1, N), jnp.bfloat16),
        grid=grid,
        in_specs=[
            pl.BlockSpec((Dp, 1), lambda j: (0, 0)),    # silu(emb) column, resident
            pl.BlockSpec((G, 1), lambda j: (0, 0)),     # per-group activation sums, resident
            pl.BlockSpec((Dp, TN), lambda j: (0, j)),   # int8 weight column tile (pipelined)
            pl.BlockSpec((G, TN), lambda j: (0, j)),    # group scales
            pl.BlockSpec((G, TN), lambda j: (0, j)),    # group zeros
            pl.BlockSpec((1, TN), lambda j: (0, j)),    # bias
        ],
        out_specs=pl.BlockSpec((1, TN), lambda j: (0, j)),
        compiler_params=pltpu.CompilerParams(
            dimension_semantics=("parallel",),
            vmem_limit_bytes=_VMEM_LIMIT),
    )(h_col, hsum, qweight, wscales, wzeros, bias2d)


def layer_norm_modulate(x2, scale, shift):
    BS, D = x2.shape
    TS = _pick_row_tile(BS, D)
    grid = (pl.cdiv(BS, TS),)
    return pl.pallas_call(
        ln_mod_kernel,
        out_shape=jax.ShapeDtypeStruct((BS, D), x2.dtype),
        grid=grid,
        in_specs=[
            pl.BlockSpec((TS, D), lambda i: (i, 0)),
            pl.BlockSpec((1, D), lambda i: (0, 0)),     # scale_msa, resident
            pl.BlockSpec((1, D), lambda i: (0, 0)),     # shift_msa, resident
        ],
        out_specs=pl.BlockSpec((TS, D), lambda i: (i, 0)),
        compiler_params=pltpu.CompilerParams(
            dimension_semantics=("parallel",),
            vmem_limit_bytes=_VMEM_LIMIT),
    )(x2, scale, shift)


@jax.jit
def ada_layer_norm_zero(x, emb, qw_prep, ws_prep, wz_prep, b_prep):
    """Forward pass. Weights must already be laid out by prepare_adaln_weights."""
    B, S, D = x.shape
    N = b_prep.shape[-1]
    n_chunks = N // D
    Dp = qw_prep.shape[0]
    G = ws_prep.shape[0]

    # Grid-invariant activation prep (tiny; hoisted out of the per-tile GEMV body).
    h = emb.astype(jnp.float32)
    h = h * jax.nn.sigmoid(h)                                    # nn.SiLU
    h = jnp.pad(h, ((0, 0), (0, Dp - D)))                        # pad to whole AWQ groups
    h_col = h.reshape(Dp, 1)                                     # lane-broadcastable column
    hsum = h.reshape(G, Dp // G).sum(axis=-1).reshape(G, 1)      # per-group sum (for zeros)

    emb_lin = awq_silu_gemv(h_col, hsum, qw_prep, ws_prep, wz_prep, b_prep)   # (1, N) bf16
    # Chunk-major columns -> the interleaved unbind(2) is a plain reshape.
    mods = emb_lin.reshape(n_chunks, D)
    shift_msa = mods[0:1]
    scale_msa = mods[1:2]
    gate_msa = mods[2:3]
    shift_mlp = mods[3:4]
    scale_mlp = mods[4:5]
    gate_mlp = mods[5:6]

    x_mod = layer_norm_modulate(x.reshape(B * S, D), scale_msa, shift_msa)
    return x_mod.reshape(B, S, D), gate_msa, shift_mlp, scale_mlp, gate_mlp


# ---------------------------------- demo --------------------------------------

if __name__ == "__main__":
    key = jax.random.PRNGKey(0)
    k1, k2, k3, k4, k5, k6 = jax.random.split(key, 6)

    # Inputs (bf16, matching the gemv_awq dtype contract).
    x = jax.random.normal(k1, (1, SEQ, DIM), dtype=jnp.float32).astype(jnp.bfloat16)
    emb = jax.random.normal(k2, (1, DIM), dtype=jnp.float32).astype(jnp.bfloat16)

    # Deterministic synthetic "AWQ" parameters: 4-bit weight values stored as int8.
    G = -(-DIM // GROUP)                                     # ceil(in_features / group_size)
    q_int = jax.random.randint(k3, (DIM, OUT), 0, 16, dtype=jnp.int32).astype(jnp.int8)
    wscales = (0.05 * jax.random.normal(k4, (G, OUT))).astype(jnp.bfloat16)
    wzeros = (0.02 * jax.random.normal(k5, (G, OUT))).astype(jnp.bfloat16)
    bias = (0.01 * jax.random.normal(k6, (OUT,))).astype(jnp.bfloat16)

    # One-time init-cost layout change (chunk-major columns, int8 weight, group padding).
    qw_p, ws_p, wz_p, b_p = prepare_adaln_weights(q_int, wscales, wzeros, bias, DIM, N_CHUNKS)

    outs = ada_layer_norm_zero(x, emb, qw_p, ws_p, wz_p, b_p)
    outs = jax.block_until_ready(outs)
    x_mod, gate_msa, shift_mlp, scale_mlp, gate_mlp = outs

    # Shape / dtype checks.
    assert x_mod.shape == (1, SEQ, DIM) and x_mod.dtype == jnp.bfloat16
    assert gate_msa.shape == (1, DIM)
    assert shift_mlp.shape == (1, DIM)
    assert scale_mlp.shape == (1, DIM)
    assert gate_mlp.shape == (1, DIM)

    # Numerical check against a pure-JAX reference (original interleaved layout).
    h = emb.astype(jnp.float32)
    h = h * jax.nn.sigmoid(h)
    sc_full = jnp.repeat(wscales.astype(jnp.float32), GROUP, axis=0)[:DIM]
    zr_full = jnp.repeat(wzeros.astype(jnp.float32), GROUP, axis=0)[:DIM]
    w_deq = q_int.astype(jnp.float32) * sc_full + zr_full
    ref_lin = h @ w_deq + bias.astype(jnp.float32)           # (1, OUT)
    ref_chunks = ref_lin.reshape(DIM, N_CHUNKS)              # [d, c] = column 6d+c
    xf = x.reshape(SEQ, DIM).astype(jnp.float32)
    mu = xf.mean(-1, keepdims=True)
    var = ((xf - mu) ** 2).mean(-1, keepdims=True)
    ref_x = ((xf - mu) / jnp.sqrt(var + 1e-6)) * ref_chunks[:, 1][None] + ref_chunks[:, 0][None]

    tol = dict(atol=0.2, rtol=0.1)  # bf16 storage + reassociated group dequant
    assert jnp.allclose(x_mod.reshape(SEQ, DIM).astype(jnp.float32), ref_x, **tol)
    assert jnp.allclose(gate_msa.astype(jnp.float32)[0], ref_chunks[:, 2], **tol)
    assert jnp.allclose(shift_mlp.astype(jnp.float32)[0], ref_chunks[:, 3], **tol)
    assert jnp.allclose(scale_mlp.astype(jnp.float32)[0], ref_chunks[:, 4], **tol)
    assert jnp.allclose(gate_mlp.astype(jnp.float32)[0], ref_chunks[:, 5], **tol)

    print("KERNEL_OK")
</pallas_src>

<mosaic_0001>
module attributes {stable_mosaic.version = 11 : i64} {
  func.func @awq_silu_gemv_kernel(%arg0: i32, %arg1: memref<64x1xf32, #tpu.memory_space<vmem>>, %arg2: memref<1x1xf32, #tpu.memory_space<vmem>>, %arg3: memref<64x192xi8, #tpu.memory_space<vmem>>, %arg4: memref<1x192xbf16, #tpu.memory_space<vmem>>, %arg5: memref<1x192xbf16, #tpu.memory_space<vmem>>, %arg6: memref<1x192xbf16, #tpu.memory_space<vmem>>, %arg7: memref<1x192xbf16, #tpu.memory_space<vmem>>) attributes {dimension_semantics = [#tpu.dimension_semantics<parallel>], iteration_bounds = array<i64: 1>, scalar_prefetch = 0 : i64, scratch_operands = 0 : i64, tpu.core_type = #tpu.core_type<tc>, window_params = [{pipeline_mode = #tpu.pipeline_mode<synchronous>, transform_indices = @transform_0, window_bounds = array<i64: 64, 1>}, {pipeline_mode = #tpu.pipeline_mode<synchronous>, transform_indices = @transform_1, window_bounds = array<i64: 1, 1>}, {transform_indices = @transform_2, window_bounds = array<i64: 64, 192>}, {transform_indices = @transform_3, window_bounds = array<i64: 1, 192>}, {transform_indices = @transform_4, window_bounds = array<i64: 1, 192>}, {transform_indices = @transform_5, window_bounds = array<i64: 1, 192>}, {transform_indices = @transform_6, window_bounds = array<i64: 1, 192>}]} {
    %c0 = arith.constant 0 : index
    %c0_0 = arith.constant 0 : index
    %0 = vector.load %arg1[%c0, %c0_0] : memref<64x1xf32, #tpu.memory_space<vmem>>, vector<64x1xf32>
    %c0_1 = arith.constant 0 : index
    %c0_2 = arith.constant 0 : index
    %1 = vector.load %arg3[%c0_1, %c0_2] : memref<64x192xi8, #tpu.memory_space<vmem>>, vector<64x192xi8>
    %2 = arith.sitofp %1 : vector<64x192xi8> to vector<64x192xf32>
    %3 = vector.broadcast %0 : vector<64x1xf32> to vector<64x192xf32>
    %4 = arith.mulf %2, %3 : vector<64x192xf32>
    %5 = vector.shape_cast %4 : vector<64x192xf32> to vector<1x64x192xf32>
    %cst = arith.constant dense<0.000000e+00> : vector<1x192xf32>
    %6 = vector.multi_reduction <add>, %5, %cst [1] : vector<1x64x192xf32> to vector<1x192xf32>
    %c0_3 = arith.constant 0 : index
    %c0_4 = arith.constant 0 : index
    %7 = vector.load %arg4[%c0_3, %c0_4] : memref<1x192xbf16, #tpu.memory_space<vmem>>, vector<1x192xbf16>
    %8 = arith.extf %7 : vector<1x192xbf16> to vector<1x192xf32>
    %9 = arith.mulf %6, %8 : vector<1x192xf32>
    %c0_5 = arith.constant 0 : index
    %c0_6 = arith.constant 0 : index
    %10 = vector.load %arg2[%c0_5, %c0_6] : memref<1x1xf32, #tpu.memory_space<vmem>>, vector<1x1xf32>
    %c0_7 = arith.constant 0 : index
    %c0_8 = arith.constant 0 : index
    %11 = vector.load %arg5[%c0_7, %c0_8] : memref<1x192xbf16, #tpu.memory_space<vmem>>, vector<1x192xbf16>
    %12 = arith.extf %11 : vector<1x192xbf16> to vector<1x192xf32>
    %13 = vector.broadcast %10 : vector<1x1xf32> to vector<1x192xf32>
    %14 = arith.mulf %13, %12 : vector<1x192xf32>
    %15 = arith.addf %9, %14 : vector<1x192xf32>
    %cst_9 = arith.constant dense<0.000000e+00> : vector<192xf32>
    %16 = vector.multi_reduction <add>, %15, %cst_9 [0] : vector<1x192xf32> to vector<192xf32>
    %17 = vector.shape_cast %16 : vector<192xf32> to vector<1x192xf32>
    %c0_10 = arith.constant 0 : index
    %c0_11 = arith.constant 0 : index
    %18 = vector.load %arg6[%c0_10, %c0_11] : memref<1x192xbf16, #tpu.memory_space<vmem>>, vector<1x192xbf16>
    %19 = arith.extf %18 : vector<1x192xbf16> to vector<1x192xf32>
    %20 = arith.addf %17, %19 : vector<1x192xf32>
    %21 = arith.truncf %20 : vector<1x192xf32> to vector<1x192xbf16>
    %c0_12 = arith.constant 0 : index
    %c0_13 = arith.constant 0 : index
    %22 = vector.load %arg7[%c0_12, %c0_13] : memref<1x192xbf16, #tpu.memory_space<vmem>>, vector<1x192xbf16>
    tpu.vector_store %arg7[%c0_12, %c0_13], %21 {strides = array<i32>} : memref<1x192xbf16, #tpu.memory_space<vmem>>, vector<1x192xbf16>,
    return
  }
  func.func @transform_0(%arg0: i32) -> (i32, i32) {
    %c0_i32 = arith.constant 0 : i32
    %c0_i32_0 = arith.constant 0 : i32
    %c0_i32_1 = arith.constant 0 : i32
    return %c0_i32, %c0_i32_0 : i32, i32
  }
  func.func @transform_1(%arg0: i32) -> (i32, i32) {
    %c0_i32 = arith.constant 0 : i32
    %c0_i32_0 = arith.constant 0 : i32
    %c0_i32_1 = arith.constant 0 : i32
    return %c0_i32, %c0_i32_0 : i32, i32
  }
  func.func @transform_2(%arg0: i32) -> (i32, i32) {
    %c0_i32 = arith.constant 0 : i32
    %c0_i32_0 = arith.constant 0 : i32
    return %c0_i32, %arg0 : i32, i32
  }
  func.func @transform_3(%arg0: i32) -> (i32, i32) {
    %c0_i32 = arith.constant 0 : i32
    %c0_i32_0 = arith.constant 0 : i32
    return %c0_i32, %arg0 : i32, i32
  }
  func.func @transform_4(%arg0: i32) -> (i32, i32) {
    %c0_i32 = arith.constant 0 : i32
    %c0_i32_0 = arith.constant 0 : i32
    return %c0_i32, %arg0 : i32, i32
  }
  func.func @transform_5(%arg0: i32) -> (i32, i32) {
    %c0_i32 = arith.constant 0 : i32
    %c0_i32_0 = arith.constant 0 : i32
    return %c0_i32, %arg0 : i32, i32
  }
  func.func @transform_6(%arg0: i32) -> (i32, i32) {
    %c0_i32 = arith.constant 0 : i32
    %c0_i32_0 = arith.constant 0 : i32
    return %c0_i32, %arg0 : i32, i32
  }
}

module attributes {stable_mosaic.version = 11 : i64} {
  func.func @ln_mod_kernel(%arg0: i32, %arg1: memref<8x32xbf16, #tpu.memory_space<vmem>>, %arg2: memref<1x32xbf16, #tpu.memory_space<vmem>>, %arg3: memref<1x32xbf16, #tpu.memory_space<vmem>>, %arg4: memref<8x32xbf16, #tpu.memory_space<vmem>>) attributes {dimension_semantics = [#tpu.dimension_semantics<parallel>], iteration_bounds = array<i64: 1>, scalar_prefetch = 0 : i64, scratch_operands = 0 : i64, tpu.core_type = #tpu.core_type<tc>, window_params = [{transform_indices = @transform_0, window_bounds = array<i64: 8, 32>}, {pipeline_mode = #tpu.pipeline_mode<synchronous>, transform_indices = @transform_1, window_bounds = array<i64: 1, 32>}, {pipeline_mode = #tpu.pipeline_mode<synchronous>, transform_indices = @transform_2, window_bounds = array<i64: 1, 32>}, {transform_indices = @transform_3, window_bounds = array<i64: 8, 32>}]} {
    %c0 = arith.constant 0 : index
    %c0_0 = arith.constant 0 : index
    %0 = vector.load %arg1[%c0, %c0_0] : memref<8x32xbf16, #tpu.memory_space<vmem>>, vector<8x32xbf16>
    %1 = arith.extf %0 : vector<8x32xbf16> to vector<8x32xf32>
    %cst = arith.constant dense<0.000000e+00> : vector<8xf32>
    %2 = vector.multi_reduction <add>, %1, %cst [1] : vector<8x32xf32> to vector<8xf32>
    %3 = vector.shape_cast %2 : vector<8xf32> to vector<8x1xf32>
    %cst_1 = arith.constant 3.200000e+01 : f32
    %4 = vector.broadcast %cst_1 : f32 to vector<8x1xf32>
    %5 = arith.divf %3, %4 : vector<8x1xf32>
    %6 = arith.mulf %1, %1 : vector<8x32xf32>
    %cst_2 = arith.constant dense<0.000000e+00> : vector<8xf32>
    %7 = vector.multi_reduction <add>, %6, %cst_2 [1] : vector<8x32xf32> to vector<8xf32>
    %8 = vector.shape_cast %7 : vector<8xf32> to vector<8x1xf32>
    %cst_3 = arith.constant 3.200000e+01 : f32
    %9 = vector.broadcast %cst_3 : f32 to vector<8x1xf32>
    %10 = arith.divf %8, %9 : vector<8x1xf32>
    %11 = arith.mulf %5, %5 : vector<8x1xf32>
    %12 = arith.subf %10, %11 : vector<8x1xf32>
    %cst_4 = arith.constant 0.000000e+00 : f32
    %13 = vector.broadcast %cst_4 : f32 to vector<8x1xf32>
    %14 = arith.maximumf %12, %13 : vector<8x1xf32>
    %cst_5 = arith.constant 9.99999997E-7 : f32
    %15 = vector.broadcast %cst_5 : f32 to vector<8x1xf32>
    %16 = arith.addf %14, %15 : vector<8x1xf32>
    %17 = math.rsqrt %16 : vector<8x1xf32>
    %18 = vector.broadcast %5 : vector<8x1xf32> to vector<8x32xf32>
    %19 = arith.subf %1, %18 : vector<8x32xf32>
    %20 = vector.broadcast %17 : vector<8x1xf32> to vector<8x32xf32>
    %21 = arith.mulf %19, %20 : vector<8x32xf32>
    %c0_6 = arith.constant 0 : index
    %c0_7 = arith.constant 0 : index
    %22 = vector.load %arg2[%c0_6, %c0_7] : memref<1x32xbf16, #tpu.memory_space<vmem>>, vector<1x32xbf16>
    %23 = arith.extf %22 : vector<1x32xbf16> to vector<1x32xf32>
    %24 = vector.broadcast %23 : vector<1x32xf32> to vector<8x32xf32>
    %25 = arith.mulf %21, %24 : vector<8x32xf32>
    %c0_8 = arith.constant 0 : index
    %c0_9 = arith.constant 0 : index
    %26 = vector.load %arg3[%c0_8, %c0_9] : memref<1x32xbf16, #tpu.memory_space<vmem>>, vector<1x32xbf16>
    %27 = arith.extf %26 : vector<1x32xbf16> to vector<1x32xf32>
    %28 = vector.broadcast %27 : vector<1x32xf32> to vector<8x32xf32>
    %29 = arith.addf %25, %28 : vector<8x32xf32>
    %30 = arith.truncf %29 : vector<8x32xf32> to vector<8x32xbf16>
    %c0_10 = arith.constant 0 : index
    %c0_11 = arith.constant 0 : index
    %31 = vector.load %arg4[%c0_10, %c0_11] : memref<8x32xbf16, #tpu.memory_space<vmem>>, vector<8x32xbf16>
    tpu.vector_store %arg4[%c0_10, %c0_11], %30 {strides = array<i32>} : memref<8x32xbf16, #tpu.memory_space<vmem>>, vector<8x32xbf16>,
    return
  }
  func.func @transform_0(%arg0: i32) -> (i32, i32) {
    %c0_i32 = arith.constant 0 : i32
    %c0_i32_0 = arith.constant 0 : i32
    return %arg0, %c0_i32 : i32, i32
  }
  func.func @transform_1(%arg0: i32) -> (i32, i32) {
    %c0_i32 = arith.constant 0 : i32
    %c0_i32_0 = arith.constant 0 : i32
    %c0_i32_1 = arith.constant 0 : i32
    return %c0_i32, %c0_i32_0 : i32, i32
  }
  func.func @transform_2(%arg0: i32) -> (i32, i32) {
    %c0_i32 = arith.constant 0 : i32
    %c0_i32_0 = arith.constant 0 : i32
    %c0_i32_1 = arith.constant 0 : i32
    return %c0_i32, %c0_i32_0 : i32, i32
  }
  func.func @transform_3(%arg0: i32) -> (i32, i32) {
    %c0_i32 = arith.constant 0 : i32
    %c0_i32_0 = arith.constant 0 : i32
    return %arg0, %c0_i32 : i32, i32
  }
}

</mosaic_0001>

<llo_original>
// kernel: ada_layer_norm_zero.3
$region0: #{ada_layer_norm_zero.3}
  #allocation0 [shape = 'u32[]', space=smem, size = 0x4, offset = 0x4, fixed_abs, tag = 'smem constant byte address 0x4 - core index']
  #allocation1 [shape = 'u32[144,128]{1,0:T(1,128)}', space=vmem, size = 0x12000, scoped, tag = 'internal scratch']
  %s0 = inlined_call_operand.vmem [shape: bf16[8,32], index: 0, kind: input, shape index: {}]
  %s1 = inlined_call_operand.vmem [shape: bf16[1,32], index: 1, kind: input, shape index: {}]
  %s2 = inlined_call_operand.vmem [shape: bf16[1,32], index: 2, kind: input, shape index: {}]
  %s3 = inlined_call_operand.hbm [shape: bf16[8,32], index: 3, kind: output, shape index: {}]
  %s4 = sld [smem:[#allocation0]]
  $region22: #{ada_layer_norm_zero.3} parent=0
    _
  %s6 = ssub.s32 1, %s4
  %s7 = scalar_select 0, %s6, %s4
  $region1: #{ada_layer_norm_zero.3} parent=0
    #allocation2 [shape = 'u8[2048]{0}', space=vmem, size = 0x800, scoped, tag = 'output window, operand 0, single buffered']
    #allocation3 [shape = 's32[1]{0}', space=sflag, size = 0x4, scoped, tag = 'scoped memory for ada_layer_norm_zero.3']
    %8 = vsyncpa [#allocation3], 0
    // Predicated region
    $region2: #{ada_layer_norm_zero.3} parent=1 // pred_check
      _
    $region3: #{ada_layer_norm_zero.3} parent=1 // pred_check_branch
      %10 = sbr.rel (0) target = $region5
    $region4: #{ada_layer_norm_zero.3} parent=1 // pred_region
      _
    $region5: #{ada_layer_norm_zero.3} parent=1 // pred_fallthru
      _
    // Predicated region
    $region6: #{ada_layer_norm_zero.3} parent=1 // pred_check
      _
    $region7: #{ada_layer_norm_zero.3} parent=1 // pred_check_branch
      %12 = sbr.rel (0) target = $region9
    $region8: #{ada_layer_norm_zero.3} parent=1 // pred_region
      _
    $region9: #{ada_layer_norm_zero.3} parent=1 // pred_fallthru
      _
    // Predicated region
    $region10: #{ada_layer_norm_zero.3} parent=1 // pred_check
      _
    $region11: #{ada_layer_norm_zero.3} parent=1 // pred_check_branch
      %14 = sbr.rel (0) target = $region13
    $region12: #{ada_layer_norm_zero.3} parent=1 // pred_region
      _
    $region13: #{ada_layer_norm_zero.3} parent=1 // pred_fallthru
      _
    %v15 = vld [vmem:[%s0] sm:$0xf]
    %v16 = vunpack.c.l.bf16 %v15
    %vm17 = vcmask 261120
    %v18 = vsel %vm17, %v16, 0.0
    %19 = vadd.xlane.f32.xlu0 %v18
    %v20 = vpop.xlane.xlu0 %19
    %v21 = vrcp.pop 32.0
    %v22 = vmul.f32 %v20, %v21
    %v23 = vmul.f32 %v16, %v16
    %v24 = vsel %vm17, %v23, 0.0
    %25 = vadd.xlane.f32.xlu0 %v24
    %v26 = vpop.xlane.xlu0 %25
    %v27 = vmul.f32 %v26, %v21
    %v28 = vmul.f32 %v22, %v22
    %v29 = vsub.f32 %v27, %v28
    %v30 = vmax.f32 %v29, 0.0
    %v31 = vadd.f32 %v30, 1e-06
    %v32 = vrsqrt.pop %v31
    %v33 = vsub.f32 %v16, %v22
    %v34 = vmul.f32 %v33, %v32
    %v35 = vld [vmem:[%s1] sm:$0x1]
    %v36 = vunpack.c.l.bf16 %v35
    %v37 = vlaneseq
    %v38 = vshrl.u32 %v37, 7
    %v39 = vsub.s32 0, %v38
    %v40 = vrot.slane %v36, %v39
    %v41 = vmul.f32 %v34, %v40
    %v42 = vld [vmem:[%s2] sm:$0x1]
    %v43 = vunpack.c.l.bf16 %v42
    %v44 = vlaneseq
    %v45 = vshrl.u32 %v44, 7
    %v46 = vsub.s32 0, %v45
    %v47 = vrot.slane %v43, %v46
    %v48 = vadd.f32 %v41, %v47
    %v49 = vpack.c.bf16 %v48, %v48
    %vm50 = vcmask 257024
    %51 = vst.msk [vmem:[#allocation2] sm:$0xf] %vm50, %v49
    // Predicated region
    $region14: #{ada_layer_norm_zero.3} parent=1 // pred_check
      _
    $region15: #{ada_layer_norm_zero.3} parent=1 // pred_check_branch
      %53 = sbr.rel (0) target = $region17
    $region16: #{ada_layer_norm_zero.3} parent=1 // pred_region
      %s55 = ssub.s32 64, 64
      %56 = vsyncadd [#allocation3], %s55
      %s58 = sshll.u32 [#allocation2], 4
      %s59 = int_to_ptr.vmem [resolvable:$true] %s58
      %61 = dma.vmem_to_hbm [thread:$0]  %s59, 64, %s3, [#allocation3]
    $region17: #{ada_layer_norm_zero.3} parent=1 // pred_fallthru
      _
    // Predicated region
    $region18: #{ada_layer_norm_zero.3} parent=1 // pred_check
      _
    $region19: #{ada_layer_norm_zero.3} parent=1 // pred_check_branch
      %63 = sbr.rel (0) target = $region21
    $region20: #{ada_layer_norm_zero.3} parent=1 // pred_region
      %64 = dma.done [#allocation3], 64
    $region21: #{ada_layer_norm_zero.3} parent=1 // pred_fallthru
      _
    %65 = vsyncpa [#allocation3], 1

// kernel: ada_layer_norm_zero.2
$region0: #{ada_layer_norm_zero.2}
  #allocation0 [shape = 'u32[]', space=smem, size = 0x4, offset = 0x4, fixed_abs, tag = 'smem constant byte address 0x4 - core index']
  #allocation1 [shape = 'u32[144,128]{1,0:T(1,128)}', space=vmem, size = 0x12000, scoped, tag = 'internal scratch']
  #allocation2 [shape = 'f32[1,1]{1,0:T(1,128)S(1)}', space=vmem, size = 0x200, scoped, tag = 'scoped memory for ada_layer_norm_zero.2']
  %s0 = inlined_call_operand.vmem [shape: f32[64,1], index: 0, kind: input, shape index: {}]
  %s1 = inlined_call_operand.<no memory space> [shape: f32[1,1], index: 1, kind: input, shape index: {}]
  %s2 = inlined_call_operand.vmem [shape: s8[64,192], index: 2, kind: input, shape index: {}]
  %s3 = inlined_call_operand.vmem [shape: bf16[1,192], index: 3, kind: input, shape index: {}]
  %s4 = inlined_call_operand.vmem [shape: bf16[1,192], index: 4, kind: input, shape index: {}]
  %s5 = inlined_call_operand.vmem [shape: bf16[1,192], index: 5, kind: input, shape index: {}]
  %s6 = inlined_call_operand.vmem [shape: bf16[1,192], index: 6, kind: output, shape index: {}]
  %s7 = sld [smem:[#allocation0]]
  $region34: #{ada_layer_norm_zero.2} parent=0
    _
  %s9 = ssub.s32 1, %s7
  %s10 = scalar_select 0, %s9, %s7
  %v11 = vstv %s1
  %12 = vst [vmem:[#allocation2] sm:$0x1] %v11
  // Predicated region
  $region2: #{ada_layer_norm_zero.2} parent=0 // pred_check
    _
  $region3: #{ada_layer_norm_zero.2} parent=0 // pred_check_branch
    %14 = sbr.rel (0) target = $region5
  $region4: #{ada_layer_norm_zero.2} parent=0 // pred_region
    _
  $region5: #{ada_layer_norm_zero.2} parent=0 // pred_fallthru
    _
  // Predicated region
  $region6: #{ada_layer_norm_zero.2} parent=0 // pred_check
    _
  $region7: #{ada_layer_norm_zero.2} parent=0 // pred_check_branch
    %16 = sbr.rel (0) target = $region9
  $region8: #{ada_layer_norm_zero.2} parent=0 // pred_region
    _
  $region9: #{ada_layer_norm_zero.2} parent=0 // pred_fallthru
    _
  // Predicated region
  $region10: #{ada_layer_norm_zero.2} parent=0 // pred_check
    _
  $region11: #{ada_layer_norm_zero.2} parent=0 // pred_check_branch
    %18 = sbr.rel (0) target = $region13
  $region12: #{ada_layer_norm_zero.2} parent=0 // pred_region
    _
  $region13: #{ada_layer_norm_zero.2} parent=0 // pred_fallthru
    _
  // Predicated region
  $region14: #{ada_layer_norm_zero.2} parent=0 // pred_check
    _
  $region15: #{ada_layer_norm_zero.2} parent=0 // pred_check_branch
    %20 = sbr.rel (0) target = $region17
  $region16: #{ada_layer_norm_zero.2} parent=0 // pred_region
    _
  $region17: #{ada_layer_norm_zero.2} parent=0 // pred_fallthru
    _
  // Predicated region
  $region18: #{ada_layer_norm_zero.2} parent=0 // pred_check
    _
  $region19: #{ada_layer_norm_zero.2} parent=0 // pred_check_branch
    %22 = sbr.rel (0) target = $region21
  $region20: #{ada_layer_norm_zero.2} parent=0 // pred_region
    _
  $region21: #{ada_layer_norm_zero.2} parent=0 // pred_fallthru
    _
  // Predicated region
  $region22: #{ada_layer_norm_zero.2} parent=0 // pred_check
    _
  $region23: #{ada_layer_norm_zero.2} parent=0 // pred_check_branch
    %24 = sbr.rel (0) target = $region25
  $region24: #{ada_layer_norm_zero.2} parent=0 // pred_region
    _
  $region25: #{ada_layer_norm_zero.2} parent=0 // pred_fallthru
    _
  %v25 = vld [vmem:[%s0] sm:$0xff]
  %v26 = vld [vmem:[%s0 + $0x8] sm:$0xff]
  %v27 = vld [vmem:[%s0 + $0x10] sm:$0xff]
  %v28 = vld [vmem:[%s0 + $0x18] sm:$0xff]
  %v29 = vld [vmem:[%s0 + $0x20] sm:$0xff]
  %v30 = vld [vmem:[%s0 + $0x28] sm:$0xff]
  %v31 = vld [vmem:[%s0 + $0x30] sm:$0xff]
  %v32 = vld [vmem:[%s0 + $0x38] sm:$0xff]
  %v33 = vld [vmem:[%s2] sm:$0xff]
  %v34 = vld [vmem:[%s2 + $0x8] sm:$0xff]
  %v35 = vld [vmem:[%s2 + $0x10] sm:$0xff]
  %v36 = vld [vmem:[%s2 + $0x18] sm:$0xff]
  %v37 = vunpack.c.0.s8 %v33
  %v38 = vunpack.c.0.s8 %v34
  %v39 = vunpack.c.1.s8 %v33
  %v40 = vunpack.c.1.s8 %v34
  %v41 = vunpack.c.2.s8 %v33
  %v42 = vunpack.c.2.s8 %v34
  %v43 = vunpack.c.3.s8 %v33
  %v44 = vunpack.c.3.s8 %v34
  %v45 = vunpack.c.0.s8 %v35
  %v46 = vunpack.c.0.s8 %v36
  %v47 = vunpack.c.1.s8 %v35
  %v48 = vunpack.c.1.s8 %v36
  %v49 = vunpack.c.2.s8 %v35
  %v50 = vunpack.c.2.s8 %v36
  %v51 = vunpack.c.3.s8 %v35
  %v52 = vunpack.c.3.s8 %v36
  %v53 = vcvt.s32.f32 %v37
  %v54 = vcvt.s32.f32 %v38
  %v55 = vcvt.s32.f32 %v39
  %v56 = vcvt.s32.f32 %v40
  %v57 = vcvt.s32.f32 %v41
  %v58 = vcvt.s32.f32 %v42
  %v59 = vcvt.s32.f32 %v43
  %v60 = vcvt.s32.f32 %v44
  %v61 = vcvt.s32.f32 %v45
  %v62 = vcvt.s32.f32 %v46
  %v63 = vcvt.s32.f32 %v47
  %v64 = vcvt.s32.f32 %v48
  %v65 = vcvt.s32.f32 %v49
  %v66 = vcvt.s32.f32 %v50
  %v67 = vcvt.s32.f32 %v51
  %v68 = vcvt.s32.f32 %v52
  %70 = vset.pattern.permute.xlu0 0
  %71 = vperm.xlu0 %70, %v25
  %v72 = vpop.permute.xlu0 %71
  %75 = vset.pattern.permute.xlu0 0
  %76 = vperm.xlu0 %75, %v26
  %v77 = vpop.permute.xlu0 %76
  %80 = vset.pattern.permute.xlu0 0
  %81 = vperm.xlu0 %80, %v27
  %v82 = vpop.permute.xlu0 %81
  %85 = vset.pattern.permute.xlu0 0
  %86 = vperm.xlu0 %85, %v28
  %v87 = vpop.permute.xlu0 %86
  %90 = vset.pattern.permute.xlu0 0
  %91 = vperm.xlu0 %90, %v29
  %v92 = vpop.permute.xlu0 %91
  %95 = vset.pattern.permute.xlu0 0
  %96 = vperm.xlu0 %95, %v30
  %v97 = vpop.permute.xlu0 %96
  %100 = vset.pattern.permute.xlu0 0
  %101 = vperm.xlu0 %100, %v31
  %v102 = vpop.permute.xlu0 %101
  %105 = vset.pattern.permute.xlu0 0
  %106 = vperm.xlu0 %105, %v32
  %v107 = vpop.permute.xlu0 %106
  %v109 = vmul.f32 %v53, %v72
  %v110 = vmul.f32 %v54, %v72
  %v111 = vmul.f32 %v55, %v77
  %v112 = vmul.f32 %v56, %v77
  %v113 = vmul.f32 %v57, %v82
  %v114 = vmul.f32 %v58, %v82
  %v115 = vmul.f32 %v59, %v87
  %v116 = vmul.f32 %v60, %v87
  %v117 = vmul.f32 %v61, %v92
  %v118 = vmul.f32 %v62, %v92
  %v119 = vmul.f32 %v63, %v97
  %v120 = vmul.f32 %v64, %v97
  %v121 = vmul.f32 %v65, %v102
  %v122 = vmul.f32 %v66, %v102
  %v123 = vmul.f32 %v67, %v107
  %v124 = vmul.f32 %v68, %v107
  %v125 = vadd.f32 %v109, %v111
  %v126 = vadd.f32 %v125, %v113
  %v127 = vadd.f32 %v126, %v115
  %v128 = vadd.f32 %v127, %v117
  %v129 = vadd.f32 %v128, %v119
  %v130 = vadd.f32 %v129, %v121
  %v131 = vadd.f32 %v130, %v123
  %v132 = vrot.slane %v131, 4
  %v133 = vadd.f32 %v131, %v132
  %v134 = vrot.slane %v133, 2
  %v135 = vadd.f32 %v133, %v134
  %v136 = vrot.slane %v135, 1
  %v137 = vadd.f32 %v135, %v136
  %vm138 = vcmask 523264
  %v139 = vsel %vm138, %v110, 0.0
  %v140 = vsel %vm138, %v112, 0.0
  %v141 = vadd.f32 %v139, %v140
  %v142 = vsel %vm138, %v114, 0.0
  %v143 = vadd.f32 %v141, %v142
  %v144 = vsel %vm138, %v116, 0.0
  %v145 = vadd.f32 %v143, %v144
  %v146 = vsel %vm138, %v118, 0.0
  %v147 = vadd.f32 %v145, %v146
  %v148 = vsel %vm138, %v120, 0.0
  %v149 = vadd.f32 %v147, %v148
  %v150 = vsel %vm138, %v122, 0.0
  %v151 = vadd.f32 %v149, %v150
  %v152 = vsel %vm138, %v124, 0.0
  %v153 = vadd.f32 %v151, %v152
  %v154 = vrot.slane %v153, 4
  %v155 = vadd.f32 %v153, %v154
  %v156 = vrot.slane %v155, 2
  %v157 = vadd.f32 %v155, %v156
  %v158 = vrot.slane %v157, 1
  %v159 = vadd.f32 %v157, %v158
  %v160 = vld [vmem:[%s3] sm:$0x3]
  %v161 = vunpack.c.l.bf16 %v160
  %v163 = vlaneseq
  %v164 = vshrl.u32 %v163, 7
  %v165 = vsub.s32 0, %v164
  %v166 = vrot.slane %v161, %v165
  %v167 = vlaneseq
  %v168 = vshrl.u32 %v167, 7
  %v169 = vsub.s32 2, %v168
  %v170 = vrot.slane %v161, %v169
  %v173 = vmul.f32 %v137, %v166
  %v174 = vmul.f32 %v159, %v170
  %v175 = vld [vmem:[#allocation2] sm:$0x1]
  %v176 = vld [vmem:[%s4] sm:$0x3]
  %v177 = vunpack.c.l.bf16 %v176
  %179 = vset.pattern.permute.xlu0 0
  %180 = vperm.xlu0 %179, %v175
  %v181 = vpop.permute.xlu0 %180
  %v183 = vlaneseq
  %v184 = vshrl.u32 %v183, 7
  %v185 = vsub.s32 0, %v184
  %v186 = vrot.slane %v181, %v185
  %v187 = vmul.f32 %v186, %v177
  %v189 = vlaneseq
  %v190 = vshrl.u32 %v189, 7
  %v191 = vsub.s32 0, %v190
  %v192 = vrot.slane %v187, %v191
  %v193 = vlaneseq
  %v194 = vshrl.u32 %v193, 7
  %v195 = vsub.s32 2, %v194
  %v196 = vrot.slane %v187, %v195
  %v199 = vadd.f32 %v173, %v192
  %v200 = vadd.f32 %v174, %v196
  %v201 = vadd.f32 %v199, 0.0
  %v202 = vadd.f32 %v200, 0.0
  %v203 = vld [vmem:[%s5] sm:$0x3]
  %v204 = vunpack.c.l.bf16 %v203
  %v206 = vlaneseq
  %v207 = vshrl.u32 %v206, 7
  %v208 = vsub.s32 0, %v207
  %v209 = vrot.slane %v204, %v208
  %v210 = vlaneseq
  %v211 = vshrl.u32 %v210, 7
  %v212 = vsub.s32 2, %v211
  %v213 = vrot.slane %v204, %v212
  %v216 = vadd.f32 %v201, %v209
  %v217 = vadd.f32 %v202, %v213
  %v218 = vpack.c.bf16 %v216, %v216
  %v219 = vpack.c.bf16 %v217, %v217
  %v222 = vcombine.low %v218, %v219
  %v224 = vunpack.c.l.s4 1966171168
  %v225 = vunpack.c.0.s8 %v224
  %v226 = vlaneseq
  %v227 = vshrl.u32 %v226, 7
  %v228 = vsub.s32 %v225, %v227
  %v229 = vrot.slane %v222, %v228
  %v231 = vunpack.c.l.s4 1966171168
  %v232 = vunpack.c.0.s8 %v231
  %v233 = vlaneseq
  %v234 = vshrl.u32 %v233, 7
  %v235 = vsub.s32 %v232, %v234
  %v236 = vrot.slane %v229, %v235
  %vm238 = vcmask 1040384
  %vm239 = vsmask.f32 256
  %vm240 = vmand %vm238, %vm239
  %vm241 = vcmask 517121
  %vm242 = vsmask.f32 1280
  %vm243 = vmand %vm241, %vm242
  %vm244 = vmor %vm243, %vm240
  %v245 = vld [vmem:[%s6] sm:$0x3]
  %v246 = vsel %vm244, %v236, %v245
  %247 = vst [vmem:[%s6] sm:$0x3] %v246
  // Predicated region
  $region26: #{ada_layer_norm_zero.2} parent=0 // pred_check
    _
  $region27: #{ada_layer_norm_zero.2} parent=0 // pred_check_branch
    %249 = sbr.rel (0) target = $region29
  $region28: #{ada_layer_norm_zero.2} parent=0 // pred_region
    _
  $region29: #{ada_layer_norm_zero.2} parent=0 // pred_fallthru
    _
  // Predicated region
  $region30: #{ada_layer_norm_zero.2} parent=0 // pred_check
    _
  $region31: #{ada_layer_norm_zero.2} parent=0 // pred_check_branch
    %251 = sbr.rel (0) target = $region33
  $region32: #{ada_layer_norm_zero.2} parent=0 // pred_region
    _
  $region33: #{ada_layer_norm_zero.2} parent=0 // pred_fallthru
    _

</llo_original>
